<compile_context>
chip_gen: v6e
topology: v6e:2x2x1
jax: 0.10.0
libtpu: 0.0.40
codegen_flags: <defaults>
</compile_context>

<pallas_src>
import math
import functools

import jax
import jax.numpy as jnp
from jax.experimental import pallas as pl
from jax.experimental.pallas import tpu as pltpu


def _round_up(v, m):
    return ((v + m - 1) // m) * m


def _arc_margin_kernel(x_ref, wt_ref, lbl_ref, out_ref, *,
                       cos_m, sin_m, th, mmm, scale, easy_margin):
    j = pl.program_id(0)                  # class-tile index (outer grid axis)
    tb, tn = out_ref.shape

    # scale * cosine (scale folded into W in the wrapper); bf16 x bf16 -> f32 acc.
    cos_s = jnp.dot(x_ref[...], wt_ref[...],
                    preferred_element_type=jnp.float32)           # (tb, tn)

    # One-hot mask for this class tile: col == label - j*tn  (shift the (tb,1)
    # label instead of adding j*tn to the (tb,tn) iota).
    col = jax.lax.broadcasted_iota(jnp.int32, (tb, tn), 1)
    mask = col == (lbl_ref[...] - j * tn)                         # (tb, tn) bool

    # Gather the label-column cosine per row (0.0 if the label is not in this
    # tile -- mask is then all-false and phi is never selected below).
    c_lbl = jnp.sum(jnp.where(mask, cos_s, 0.0), axis=-1,
                    keepdims=True) * (1.0 / scale)                # (tb, 1)

    # Margin math on the (tb, 1) gathered values only.
    sine = jnp.sqrt(jnp.maximum(1.0 - c_lbl * c_lbl, 0.0))
    phi = c_lbl * cos_m - sine * sin_m
    if easy_margin:
        phi = jnp.where(c_lbl > 0.0, phi, c_lbl)
    else:
        phi = jnp.where(c_lbl > th, phi, c_lbl - mmm)

    # Single vselect epilogue; scale is already applied via W.
    out_ref[...] = jnp.where(mask, phi * scale, cos_s).astype(out_ref.dtype)


def arc_margin_forward(x, weight, label, *, scale=32.0, margin=0.0,
                       easy_margin=False, tb=None, tn=None,
                       compute_dtype=jnp.bfloat16, out_dtype=jnp.float32):
    B, D = x.shape
    N, D2 = weight.shape
    assert D == D2, "in_features mismatch"

    # Tile / padding selection: lane + MXU aligned.
    D_pad = _round_up(D, 128)                     # contraction dim -> full MXU passes
    if tb is None:
        tb = min(256, _round_up(B, 8))
    if tn is None:
        tn = min(2048, _round_up(N, 128))
    B_pad = _round_up(B, tb)
    N_pad = _round_up(N, tn)

    x = x.astype(jnp.float32)
    w = weight.astype(jnp.float32)

    # F.normalize(eps=1e-12): x / max(||x||, eps) == x * rsqrt(max(||x||^2, eps^2)).
    xn = x * jax.lax.rsqrt(jnp.maximum(jnp.sum(x * x, axis=-1, keepdims=True), 1e-24))
    wn = w * jax.lax.rsqrt(jnp.maximum(jnp.sum(w * w, axis=-1, keepdims=True), 1e-24))

    # Fold scale into W, pre-transpose once to (D, N), zero-pad, cast to bf16.
    # Zero-padded classes give logit 0 and are sliced off below; padded labels
    # only affect padded rows, which are also sliced off.
    wt_p = jnp.pad((wn * scale).T,
                   ((0, D_pad - D), (0, N_pad - N))).astype(compute_dtype)
    x_p = jnp.pad(xn, ((0, B_pad - B), (0, D_pad - D))).astype(compute_dtype)
    lbl = jnp.pad(label.astype(jnp.int32), (0, B_pad - B)).reshape(B_pad, 1)

    kernel = functools.partial(
        _arc_margin_kernel,
        cos_m=math.cos(margin),
        sin_m=math.sin(margin),
        th=math.cos(math.pi - margin),
        mmm=1.0 + math.cos(math.pi - margin),
        scale=float(scale),
        easy_margin=easy_margin,
    )

    # VMEM budget: double-buffered x / W / label / out tiles, plus headroom.
    cbytes = jnp.dtype(compute_dtype).itemsize
    obytes = jnp.dtype(out_dtype).itemsize
    per_step = (tb * D_pad * cbytes + D_pad * tn * cbytes
                + tb * 4 + tb * tn * obytes)
    vmem_limit = int(min(max(4 * per_step + (2 << 20), 16 << 20), 64 << 20))

    out = pl.pallas_call(
        kernel,
        out_shape=jax.ShapeDtypeStruct((B_pad, N_pad), out_dtype),
        grid_spec=pltpu.PrefetchScalarGridSpec(
            num_scalar_prefetch=0,
            # Class-outer / batch-inner: W tile index constant across the inner
            # axis -> W is DMA'd from HBM exactly once in total.
            grid=(N_pad // tn, B_pad // tb),
            in_specs=[
                pl.BlockSpec((tb, D_pad), lambda j, i: (i, 0)),   # normalized x (bf16)
                pl.BlockSpec((D_pad, tn), lambda j, i: (0, j)),   # scale * W^T (bf16)
                pl.BlockSpec((tb, 1),     lambda j, i: (i, 0)),   # labels
            ],
            out_specs=pl.BlockSpec((tb, tn), lambda j, i: (i, j)),
        ),
        compiler_params=pltpu.CompilerParams(
            dimension_semantics=("parallel", "parallel"),
            vmem_limit_bytes=vmem_limit),
    )(x_p, wt_p, lbl)

    return out[:B, :N]


def _reference(x, weight, label, scale, margin, easy_margin):
    xn = x / jnp.maximum(jnp.linalg.norm(x, axis=1, keepdims=True), 1e-12)
    wn = weight / jnp.maximum(jnp.linalg.norm(weight, axis=1, keepdims=True), 1e-12)
    cosine = xn @ wn.T
    sine = jnp.sqrt(jnp.maximum(1.0 - cosine ** 2, 0.0))
    phi = cosine * math.cos(margin) - sine * math.sin(margin)
    if easy_margin:
        phi = jnp.where(cosine > 0, phi, cosine)
    else:
        phi = jnp.where(cosine > math.cos(math.pi - margin), phi,
                        cosine - (1.0 + math.cos(math.pi - margin)))
    one_hot = jax.nn.one_hot(label, cosine.shape[1], dtype=cosine.dtype)
    return (one_hot * phi + (1.0 - one_hot) * cosine) * scale


if __name__ == "__main__":
    # Small synthetic shapes consistent with the module's forward:
    # input (B, in_features), weight (out_features, in_features), label (B,)
    B, in_features, out_features = 8, 32, 256
    scale, margin, easy_margin = 32.0, 0.2, False

    key = jax.random.PRNGKey(0)
    kx, kw, kl = jax.random.split(key, 3)

    x = jax.random.normal(kx, (B, in_features), dtype=jnp.float32)

    # nn.init.xavier_uniform_ on a (out_features, in_features) FloatTensor
    limit = math.sqrt(6.0 / (in_features + out_features))
    weight = jax.random.uniform(kw, (out_features, in_features),
                                minval=-limit, maxval=limit, dtype=jnp.float32)

    label = jax.random.randint(kl, (B,), 0, out_features, dtype=jnp.int32)

    out = arc_margin_forward(x, weight, label, scale=scale, margin=margin,
                             easy_margin=easy_margin)
    out = jax.block_until_ready(out)

    ref = _reference(x, weight, label, scale, margin, easy_margin)
    assert out.shape == (B, out_features)
    # bf16 MXU operands on unit-normalized vectors -> ~1e-3 cosine error,
    # scaled by 32 -> allow ~0.15 absolute on the logits.
    max_err = float(jnp.max(jnp.abs(out - ref)))
    assert max_err < 0.15, f"mismatch vs reference, max_err={max_err}"

    print("KERNEL_OK")
</pallas_src>

<mosaic_0001>
module attributes {stable_mosaic.version = 11 : i64} {
  func.func @_arc_margin_kernel(%arg0: i32, %arg1: i32, %arg2: memref<8x128xbf16, #tpu.memory_space<vmem>>, %arg3: memref<128x256xbf16, #tpu.memory_space<vmem>>, %arg4: memref<8x1xi32, #tpu.memory_space<vmem>>, %arg5: memref<8x256xf32, #tpu.memory_space<vmem>>) attributes {dimension_semantics = [#tpu.dimension_semantics<parallel>, #tpu.dimension_semantics<parallel>], iteration_bounds = array<i64: 1, 1>, scalar_prefetch = 0 : i64, scratch_operands = 0 : i64, tpu.core_type = #tpu.core_type<tc>, window_params = [{transform_indices = @transform_0, window_bounds = array<i64: 8, 128>}, {transform_indices = @transform_1, window_bounds = array<i64: 128, 256>}, {transform_indices = @transform_2, window_bounds = array<i64: 8, 1>}, {transform_indices = @transform_3, window_bounds = array<i64: 8, 256>}]} {
    %c0 = arith.constant 0 : index
    %c0_0 = arith.constant 0 : index
    %0 = vector.load %arg2[%c0, %c0_0] : memref<8x128xbf16, #tpu.memory_space<vmem>>, vector<8x128xbf16>
    %c0_1 = arith.constant 0 : index
    %c0_2 = arith.constant 0 : index
    %1 = vector.load %arg3[%c0_1, %c0_2] : memref<128x256xbf16, #tpu.memory_space<vmem>>, vector<128x256xbf16>
    %cst = arith.constant dense<0.000000e+00> : vector<8x256xf32>
    %2 = tpu.matmul %0, %1, %cst {dimension_numbers = #tpu.dot_dimension_numbers<[1], [0], [0], [1], [0, 0, 1, 1], [], []>} : vector<8x128xbf16>, vector<128x256xbf16>, vector<8x256xf32> -> vector<8x256xf32>
    %3 = tpu.iota {dimensions = array<i32: 1>} : vector<8x256xi32>
    %c0_3 = arith.constant 0 : index
    %c0_4 = arith.constant 0 : index
    %4 = vector.load %arg4[%c0_3, %c0_4] : memref<8x1xi32, #tpu.memory_space<vmem>>, vector<8x1xi32>
    %c256_i32 = arith.constant 256 : i32
    %5 = arith.muli %arg0, %c256_i32 : i32
    %6 = vector.broadcast %5 : i32 to vector<8x1xi32>
    %7 = arith.subi %4, %6 : vector<8x1xi32>
    %8 = vector.broadcast %7 : vector<8x1xi32> to vector<8x256xi32>
    %9 = arith.cmpi eq, %3, %8 : vector<8x256xi32>
    %cst_5 = arith.constant 0.000000e+00 : f32
    %10 = vector.broadcast %cst_5 : f32 to vector<8x256xf32>
    %11 = arith.select %9, %2, %10 : vector<8x256xi1>, vector<8x256xf32>
    %cst_6 = arith.constant dense<0.000000e+00> : vector<8xf32>
    %12 = vector.multi_reduction <add>, %11, %cst_6 [1] : vector<8x256xf32> to vector<8xf32>
    %13 = vector.shape_cast %12 : vector<8xf32> to vector<8x1xf32>
    %cst_7 = arith.constant 3.125000e-02 : f32
    %14 = vector.broadcast %cst_7 : f32 to vector<8x1xf32>
    %15 = arith.mulf %13, %14 : vector<8x1xf32>
    %16 = arith.mulf %15, %15 : vector<8x1xf32>
    %cst_8 = arith.constant 1.000000e+00 : f32
    %17 = vector.broadcast %cst_8 : f32 to vector<8x1xf32>
    %18 = arith.subf %17, %16 : vector<8x1xf32>
    %cst_9 = arith.constant 0.000000e+00 : f32
    %19 = vector.broadcast %cst_9 : f32 to vector<8x1xf32>
    %20 = arith.maximumf %18, %19 : vector<8x1xf32>
    %21 = math.sqrt %20 : vector<8x1xf32>
    %cst_10 = arith.constant 0.980066597 : f32
    %22 = vector.broadcast %cst_10 : f32 to vector<8x1xf32>
    %23 = arith.mulf %15, %22 : vector<8x1xf32>
    %cst_11 = arith.constant 0.198669329 : f32
    %24 = vector.broadcast %cst_11 : f32 to vector<8x1xf32>
    %25 = arith.mulf %21, %24 : vector<8x1xf32>
    %26 = arith.subf %23, %25 : vector<8x1xf32>
    %cst_12 = arith.constant -0.980066597 : f32
    %27 = vector.broadcast %cst_12 : f32 to vector<8x1xf32>
    %28 = arith.cmpf ogt, %15, %27 : vector<8x1xf32>
    %cst_13 = arith.constant 0.019933423 : f32
    %29 = vector.broadcast %cst_13 : f32 to vector<8x1xf32>
    %30 = arith.subf %15, %29 : vector<8x1xf32>
    %31 = arith.select %28, %26, %30 : vector<8x1xi1>, vector<8x1xf32>
    %cst_14 = arith.constant 3.200000e+01 : f32
    %32 = vector.broadcast %cst_14 : f32 to vector<8x1xf32>
    %33 = arith.mulf %31, %32 : vector<8x1xf32>
    %34 = vector.shape_cast %33 : vector<8x1xf32> to vector<8x1xf32>
    %35 = vector.broadcast %34 : vector<8x1xf32> to vector<8x256xf32>
    %36 = arith.select %9, %35, %2 : vector<8x256xi1>, vector<8x256xf32>
    %c0_15 = arith.constant 0 : index
    %c0_16 = arith.constant 0 : index
    %37 = vector.load %arg5[%c0_15, %c0_16] : memref<8x256xf32, #tpu.memory_space<vmem>>, vector<8x256xf32>
    tpu.vector_store %arg5[%c0_15, %c0_16], %36 {strides = array<i32>} : memref<8x256xf32, #tpu.memory_space<vmem>>, vector<8x256xf32>,
    return
  }
  func.func @transform_0(%arg0: i32, %arg1: i32) -> (i32, i32) {
    %c0_i32 = arith.constant 0 : i32
    %c0_i32_0 = arith.constant 0 : i32
    return %arg1, %c0_i32 : i32, i32
  }
  func.func @transform_1(%arg0: i32, %arg1: i32) -> (i32, i32) {
    %c0_i32 = arith.constant 0 : i32
    %c0_i32_0 = arith.constant 0 : i32
    return %c0_i32, %arg0 : i32, i32
  }
  func.func @transform_2(%arg0: i32, %arg1: i32) -> (i32, i32) {
    %c0_i32 = arith.constant 0 : i32
    %c0_i32_0 = arith.constant 0 : i32
    return %arg1, %c0_i32 : i32, i32
  }
  func.func @transform_3(%arg0: i32, %arg1: i32) -> (i32, i32) {
    %c0_i32 = arith.constant 0 : i32
    return %arg1, %arg0 : i32, i32
  }
}

</mosaic_0001>

<llo_original>
// kernel: tpu_custom_call.1
$region0: #{tpu_custom_call.1}
  #allocation0 [shape = 'u32[]', space=smem, size = 0x4, offset = 0x4, fixed_abs, tag = 'smem constant byte address 0x4 - core index']
  #allocation1 [shape = 'u32[144,128]{1,0:T(1,128)}', space=vmem, size = 0x12000, scoped, tag = 'internal scratch']
  %s0 = inlined_call_operand.vmem [shape: bf16[8,128], index: 0, kind: input, shape index: {}]
  %s1 = inlined_call_operand.hbm [shape: bf16[128,256], index: 1, kind: input, shape index: {}]
  %s2 = inlined_call_operand.vmem [shape: s32[8,1], index: 2, kind: input, shape index: {}]
  %s3 = inlined_call_operand.hbm [shape: f32[8,256], index: 3, kind: output, shape index: {}]
  %s4 = sld [smem:[#allocation0]]
  $region26: #{tpu_custom_call.1} parent=0
    _
  %s6 = ssub.s32 1, %s4
  %s7 = scalar_select 0, %s6, %s4
  $region1: #{tpu_custom_call.1} parent=0
    #allocation2 [shape = 'u8[65536]{0}', space=vmem, size = 0x10000, scoped, tag = 'input window, operand 1, single buffered']
    #allocation3 [shape = 's32[1]{0}', space=sflag, size = 0x4, scoped, tag = 'scoped memory for tpu_custom_call.1']
    #allocation4 [shape = 's32[1]{0}', space=sflag, size = 0x4, scoped, tag = 'scoped memory for tpu_custom_call.1']
    #allocation5 [shape = 'u8[8192]{0}', space=vmem, size = 0x2000, scoped, tag = 'output window, operand 0, single buffered']
    %8 = vsyncpa [#allocation3], 0
    %9 = vsyncpa [#allocation4], 0
    // Predicated region
    $region2: #{tpu_custom_call.1} parent=1 // pred_check
      _
    $region3: #{tpu_custom_call.1} parent=1 // pred_check_branch
      %11 = sbr.rel (0) target = $region5
    $region4: #{tpu_custom_call.1} parent=1 // pred_region
      _
    $region5: #{tpu_custom_call.1} parent=1 // pred_fallthru
      _
    // Predicated region
    $region6: #{tpu_custom_call.1} parent=1 // pred_check
      _
    $region7: #{tpu_custom_call.1} parent=1 // pred_check_branch
      %13 = sbr.rel (0) target = $region9
    $region8: #{tpu_custom_call.1} parent=1 // pred_region
      %s15 = ssub.s32 2048, 2048
      %16 = vsyncadd [#allocation3], %s15
      %s17 = sshll.u32 [#allocation2], 4
      %s18 = int_to_ptr.vmem [resolvable:$true] %s17
      %23 = dma.hbm_to_vmem [thread:$0]  %s1, 2048, %s18, [#allocation3], 128, 128, 8
    $region9: #{tpu_custom_call.1} parent=1 // pred_fallthru
      _
    // Predicated region
    $region10: #{tpu_custom_call.1} parent=1 // pred_check
      _
    $region11: #{tpu_custom_call.1} parent=1 // pred_check_branch
      %25 = sbr.rel (0) target = $region13
    $region12: #{tpu_custom_call.1} parent=1 // pred_region
      _
    $region13: #{tpu_custom_call.1} parent=1 // pred_fallthru
      _
    // Predicated region
    $region14: #{tpu_custom_call.1} parent=1 // pred_check
      _
    $region15: #{tpu_custom_call.1} parent=1 // pred_check_branch
      %27 = sbr.rel (0) target = $region17
    $region16: #{tpu_custom_call.1} parent=1 // pred_region
      %28 = dma.done [#allocation3], 2048
    $region17: #{tpu_custom_call.1} parent=1 // pred_fallthru
      _
    %v30 = vld [vmem:[%s0] sm:$0xf]
    %v31 = vld [vmem:[#allocation2] sm:$0xff]
    %v32 = vld [vmem:[#allocation2 + $0x8] sm:$0xff]
    %v33 = vld [vmem:[#allocation2 + $0x10] sm:$0xff]
    %v34 = vld [vmem:[#allocation2 + $0x18] sm:$0xff]
    %v35 = vld [vmem:[#allocation2 + $0x20] sm:$0xff]
    %v36 = vld [vmem:[#allocation2 + $0x28] sm:$0xff]
    %v37 = vld [vmem:[#allocation2 + $0x30] sm:$0xff]
    %v38 = vld [vmem:[#allocation2 + $0x38] sm:$0xff]
    %v39 = vld [vmem:[#allocation2 + $0x40] sm:$0xff]
    %v40 = vld [vmem:[#allocation2 + $0x48] sm:$0xff]
    %v41 = vld [vmem:[#allocation2 + $0x50] sm:$0xff]
    %v42 = vld [vmem:[#allocation2 + $0x58] sm:$0xff]
    %v43 = vld [vmem:[#allocation2 + $0x60] sm:$0xff]
    %v44 = vld [vmem:[#allocation2 + $0x68] sm:$0xff]
    %v45 = vld [vmem:[#allocation2 + $0x70] sm:$0xff]
    %v46 = vld [vmem:[#allocation2 + $0x78] sm:$0xff]
    %v63 = vunpack.c.l.b16 %v31
    %v64 = vunpack.c.h.b16 %v31
    %v65 = vunpack.c.l.b16 %v32
    %v66 = vunpack.c.h.b16 %v32
    %v67 = vunpack.c.l.b16 %v33
    %v68 = vunpack.c.h.b16 %v33
    %v69 = vunpack.c.l.b16 %v34
    %v70 = vunpack.c.h.b16 %v34
    %v71 = vunpack.c.l.b16 %v35
    %v72 = vunpack.c.h.b16 %v35
    %v73 = vunpack.c.l.b16 %v36
    %v74 = vunpack.c.h.b16 %v36
    %v75 = vunpack.c.l.b16 %v37
    %v76 = vunpack.c.h.b16 %v37
    %v77 = vunpack.c.l.b16 %v38
    %v78 = vunpack.c.h.b16 %v38
    %v79 = vunpack.c.l.b16 %v39
    %v80 = vunpack.c.h.b16 %v39
    %v81 = vunpack.c.l.b16 %v40
    %v82 = vunpack.c.h.b16 %v40
    %v83 = vunpack.c.l.b16 %v41
    %v84 = vunpack.c.h.b16 %v41
    %v85 = vunpack.c.l.b16 %v42
    %v86 = vunpack.c.h.b16 %v42
    %v87 = vunpack.c.l.b16 %v43
    %v88 = vunpack.c.h.b16 %v43
    %v89 = vunpack.c.l.b16 %v44
    %v90 = vunpack.c.h.b16 %v44
    %v91 = vunpack.c.l.b16 %v45
    %v92 = vunpack.c.h.b16 %v45
    %v93 = vunpack.c.l.b16 %v46
    %v94 = vunpack.c.h.b16 %v46
    %v95 = vpack.c.b16 %v65, %v63
    %v96 = vpack.c.b16 %v66, %v64
    %v97 = vpack.c.b16 %v69, %v67
    %v98 = vpack.c.b16 %v70, %v68
    %v99 = vpack.c.b16 %v73, %v71
    %v100 = vpack.c.b16 %v74, %v72
    %v101 = vpack.c.b16 %v77, %v75
    %v102 = vpack.c.b16 %v78, %v76
    %v103 = vpack.c.b16 %v81, %v79
    %v104 = vpack.c.b16 %v82, %v80
    %v105 = vpack.c.b16 %v85, %v83
    %v106 = vpack.c.b16 %v86, %v84
    %v107 = vpack.c.b16 %v89, %v87
    %v108 = vpack.c.b16 %v90, %v88
    %v109 = vpack.c.b16 %v93, %v91
    %v110 = vpack.c.b16 %v94, %v92
    %127 = vmatprep.subr.bf16.mxu0 %v110
    %128 = vmatpush1.bf16.msra.mxu0 %v109
    %129 = vmatprep.subr.bf16.mxu0 %v108
    %130 = vmatpush1.bf16.msra.mxu0 %v107
    %131 = vmatprep.subr.bf16.mxu0 %v106
    %132 = vmatpush1.bf16.msra.mxu0 %v105
    %133 = vmatprep.subr.bf16.mxu0 %v104
    %134 = vmatpush1.bf16.msra.mxu0 %v103
    %135 = vmatprep.subr.bf16.mxu0 %v102
    %136 = vmatpush1.bf16.msra.mxu0 %v101
    %137 = vmatprep.subr.bf16.mxu0 %v100
    %138 = vmatpush1.bf16.msra.mxu0 %v99
    %139 = vmatprep.subr.bf16.mxu0 %v98
    %140 = vmatpush1.bf16.msra.mxu0 %v97
    %141 = vmatprep.subr.bf16.mxu0 %v96
    %142 = vmatpush1.bf16.msra.mxu0 %v95
    %143 = vmatprep.subr.bf16.mxu0 0
    %144 = vmatpush2.bf16.msra.mxu0 0
    %145 = vmatprep.subr.bf16.mxu0 0
    %146 = vmatpush2.bf16.msra.mxu0 0
    %147 = vmatprep.subr.bf16.mxu0 0
    %148 = vmatpush2.bf16.msra.mxu0 0
    %149 = vmatprep.subr.bf16.mxu0 0
    %150 = vmatpush2.bf16.msra.mxu0 0
    %151 = vmatprep.subr.bf16.mxu0 0
    %152 = vmatpush2.bf16.msra.mxu0 0
    %153 = vmatprep.subr.bf16.mxu0 0
    %154 = vmatpush2.bf16.msra.mxu0 0
    %155 = vmatprep.subr.bf16.mxu0 0
    %156 = vmatpush2.bf16.msra.mxu0 0
    %157 = vmatprep.subr.bf16.mxu0 0
    %158 = vmatpush2.bf16.msra.mxu0 0
    %159 = vmatprep.mubr.bf16.mxu0 0
    %160 = vmatmul.mubr.bf16.gmra.mxu0 %v30
    %v161 = vpop.f32.mrf.mxu0
    %v162 = vadd.f32 0.0, %v161
    %v163 = vpop.f32.mrf.mxu0
    %v164 = vadd.f32 0.0, %v163
    %v165 = vpop.f32.mrf.mxu0
    %v166 = vpop.f32.mrf.mxu0
    %167 = vdwg.mxu0
    %v168 = vlaneseq
    %v169 = vand.u32 %v168, 127
    %v170 = vadd.s32 %v169, 128
    %v171 = vld [vmem:[%s2] sm:$0xff]
    %s172 = smul.u32 0, 256
    %v173 = vstv %s172
    %v174 = vsub.s32 %v171, %v173
    %175 = vset.pattern.permute.xlu0 0
    %176 = vperm.xlu0 %175, %v174
    %v177 = vpop.permute.xlu0 %176
    %vm178 = vcmp.eq.s32.totalorder %v169, %v177
    %vm179 = vcmp.eq.s32.totalorder %v170, %v177
    %v180 = vsel %vm178, %v162, 0.0
    %v181 = vsel %vm179, %v164, 0.0
    %v182 = vadd.f32 %v180, %v181
    %183 = vadd.xlane.f32.xlu0 %v182
    %v184 = vpop.xlane.xlu0 %183
    %v185 = vmul.f32 %v184, 0.03125
    %v186 = vmul.f32 %v185, %v185
    %v187 = vsub.f32 1.0, %v186
    %v188 = vmax.f32 %v187, 0.0
    %v189 = vrsqrt.pop %v188
    %v190 = vmul.f32 %v188, %v189
    %vm191 = vcmp.eq.f32.partialorder %v188, inf
    %v192 = vsel %vm191, %v188, %v190
    %vm193 = vcmp.eq.f32.partialorder %v188, 0.0
    %v194 = vand.u32 %v188, 2147483648
    %v195 = vsel %vm193, %v194, %v192
    %v196 = vmul.f32 %v185, 0.9800666
    %v197 = vmul.f32 %v195, 0.19866933
    %v198 = vsub.f32 %v196, %v197
    %vm199 = vcmp.gt.f32.partialorder %v185, -0.9800666
    %v200 = vsub.f32 %v185, 0.019933423
    %v201 = vsel %vm199, %v198, %v200
    %v202 = vmul.f32 %v201, 32.0
    %v203 = vsel %vm178, %v202, %v162
    %v204 = vsel %vm179, %v202, %v164
    %205 = vst [vmem:[#allocation5] sm:$0xff] %v203
    %206 = vst [vmem:[#allocation5 + $0x8] sm:$0xff] %v204
    // Predicated region
    $region18: #{tpu_custom_call.1} parent=1 // pred_check
      _
    $region19: #{tpu_custom_call.1} parent=1 // pred_check_branch
      %208 = sbr.rel (0) target = $region21
    $region20: #{tpu_custom_call.1} parent=1 // pred_region
      %s210 = ssub.s32 256, 256
      %211 = vsyncadd [#allocation4], %s210
      %s213 = sshll.u32 [#allocation5], 4
      %s214 = int_to_ptr.vmem [resolvable:$true] %s213
      %216 = dma.vmem_to_hbm [thread:$0]  %s214, 256, %s3, [#allocation4]
    $region21: #{tpu_custom_call.1} parent=1 // pred_fallthru
      _
    // Predicated region
    $region22: #{tpu_custom_call.1} parent=1 // pred_check
      _
    $region23: #{tpu_custom_call.1} parent=1 // pred_check_branch
      %218 = sbr.rel (0) target = $region25
    $region24: #{tpu_custom_call.1} parent=1 // pred_region
      %219 = dma.done [#allocation4], 256
    $region25: #{tpu_custom_call.1} parent=1 // pred_fallthru
      _
    %220 = vsyncpa [#allocation3], 1
    %221 = vsyncpa [#allocation4], 1

</llo_original>
